<compile_context>
chip_gen: v5e
topology: v5e:2x2
jax: 0.10.0
libtpu: 0.0.40
codegen_flags: <defaults>
</compile_context>

<pallas_src>
import functools

import numpy as np
import jax
import jax.numpy as jnp
from jax import lax
from jax.experimental import pallas as pl
from jax.experimental.pallas import tpu as pltpu

_BN_EPS = 1e-5


# ----------------------------------------------------------------------------
# Kernel 1: fused social pooling + mlp_pool Linear.
#   grid = (num_row_tiles,), each step handles `tile_i` target pedestrians.
#   y[i] = bias + sum_c onehot_c[i,:] @ A[c]   with A[c] = hid @ W_c (precomputed)
# ----------------------------------------------------------------------------
def _pool_linear_kernel(row_ref, col_ref, a_ref, b_ref, y_ref, *,
                        tile_i, grid_size, g2, h_out, neighborhood_size):
    t = pl.program_id(0)
    i0 = pl.multiple_of(t * tile_i, tile_i)
    G = float(grid_size)
    ns = neighborhood_size

    # i-side (target pedestrian) geometry for this tile: (tile_i, 3) = [x, y, seq]
    ri = row_ref[...]
    xi = ri[:, 0:1]
    yi = ri[:, 1:2]
    si = ri[:, 2:3]
    # j-side (neighbour) geometry, ALL pedestrians: (3, N) rows = [x; y; seq]
    xj = col_ref[0:1, :]
    yj = col_ref[1:2, :]
    sj = col_ref[2:3, :]

    # get_bounds()
    tl_x = xi - ns * 0.5
    tl_y = yi + ns * 0.5
    br_x = xi + ns * 0.5
    br_y = yi - ns * 0.5

    # get_grid_locations()
    cell_x = jnp.floor((xj - tl_x) / ns * G)
    cell_y = jnp.floor((tl_y - yj) / ns * G)
    cell = (cell_x + cell_y * G).astype(jnp.int32)              # (tile_i, N)

    # out-of-neighbourhood / self / cross-sequence exclusion (these pairs land
    # in the torch code's trash bin at index 0 and contribute nothing).
    oob = (xj >= br_x) | (xj <= tl_x) | (yj >= tl_y) | (yj <= br_y)
    ii = i0 + lax.broadcasted_iota(jnp.int32, oob.shape, 0)
    jj = lax.broadcasted_iota(jnp.int32, oob.shape, 1)
    valid = ((si == sj) & jnp.logical_not(oob) & (ii != jj)
             & (cell >= 0) & (cell < g2))                       # (tile_i, N)
    # validity folded once; per-cell masks are a single compare below.
    cellv = jnp.where(valid, cell, -1)                          # (tile_i, N)

    # scatter_add + Linear fused as per-cell one-hot matmuls against A[c];
    # bf16 operands, f32 accumulation; block-diagonality via `si == sj`.
    acc = jnp.zeros((tile_i, h_out), jnp.float32)
    for c in range(g2):                                         # static unroll
        m = (cellv == c).astype(jnp.bfloat16)                   # (tile_i, N)
        acc = acc + jnp.dot(m, a_ref[c], preferred_element_type=jnp.float32)
    y_ref[...] = acc + b_ref[...]


# ----------------------------------------------------------------------------
# Kernel 2: BatchNorm1d (training-mode batch stats, biased variance) + ReLU,
#           single grid step over the full (tiny) activation.
# ----------------------------------------------------------------------------
def _bn_relu_kernel(y_ref, gamma_ref, beta_ref, out_ref, *, n_valid, eps):
    y = y_ref[...]                                              # (n_pad, H_out)
    rows = lax.broadcasted_iota(jnp.int32, y.shape, 0)
    yv = jnp.where(rows < n_valid, y, 0.0)                      # mask padded rows
    inv_n = 1.0 / n_valid
    mean = jnp.sum(yv, axis=0, keepdims=True) * inv_n
    var = jnp.sum(yv * yv, axis=0, keepdims=True) * inv_n - mean * mean
    scale = gamma_ref[...] * lax.rsqrt(var + eps)
    shift = beta_ref[...] - mean * scale
    out_ref[...] = jnp.maximum(y * scale + shift, 0.0)


# ----------------------------------------------------------------------------
# Wrapper reproducing SocialPooling.forward
# ----------------------------------------------------------------------------
def social_pooling_forward(h_states, seq_start_end, end_pos, params, *,
                           h_dim, grid_size, neighborhood_size, tile_i=None):
    w, b, gamma, beta = params
    hs = jnp.asarray(h_states, jnp.float32).reshape(-1, h_dim)
    pos = jnp.asarray(end_pos, jnp.float32)
    N = hs.shape[0]
    G2 = grid_size * grid_size
    H_out = int(np.asarray(w).shape[1])

    if tile_i is None:
        tile_i = min(128, max(8, -(-N // 8) * 8))
    n_pad = -(-N // tile_i) * tile_i
    T = n_pad // tile_i
    pad = n_pad - N

    # Host-side one-time prep: sequence ids, padding, the two tiny geometry
    # tables, and the tile-invariant per-cell projection A[c] = hid @ W_c.
    # Padded pedestrians get seq_id = -1 (never matches a real pedestrian) and
    # zero hidden state, so they contribute exactly nothing.
    seq_id = np.full((n_pad,), -1.0, dtype=np.float32)
    for s_idx, (start, end) in enumerate(seq_start_end):
        seq_id[int(start):int(end)] = float(s_idx)

    hs_p = jnp.pad(hs, ((0, pad), (0, 0)))
    pos_p = jnp.pad(pos, ((0, pad), (0, 0)))
    row_info = jnp.concatenate([pos_p, jnp.asarray(seq_id)[:, None]], axis=1)
    col_info = row_info.T

    w_f32 = jnp.asarray(w, jnp.float32).reshape(G2, h_dim, H_out)
    A = jnp.einsum('nh,chd->cnd', hs_p, w_f32).astype(jnp.bfloat16)  # (G2, n_pad, H_out)
    bias = jnp.asarray(b, jnp.float32).reshape(1, H_out)

    kernel1 = functools.partial(
        _pool_linear_kernel, tile_i=tile_i, grid_size=grid_size, g2=G2,
        h_out=H_out, neighborhood_size=float(neighborhood_size))
    y = pl.pallas_call(
        kernel1,
        grid=(T,),
        in_specs=[
            pl.BlockSpec((tile_i, 3), lambda t: (t, 0)),            # row geom (tiled)
            pl.BlockSpec((3, n_pad), lambda t: (0, 0)),             # col geom (resident)
            pl.BlockSpec((G2, n_pad, H_out), lambda t: (0, 0, 0)),  # A        (resident)
            pl.BlockSpec((1, H_out), lambda t: (0, 0)),             # bias     (resident)
        ],
        out_specs=pl.BlockSpec((tile_i, H_out), lambda t: (t, 0)),
        out_shape=jax.ShapeDtypeStruct((n_pad, H_out), jnp.float32),
        compiler_params=pltpu.CompilerParams(
            dimension_semantics=("parallel",),
            vmem_limit_bytes=32 * 1024 * 1024),
    )(row_info, col_info, A, bias)

    kernel2 = functools.partial(_bn_relu_kernel, n_valid=N, eps=_BN_EPS)
    out = pl.pallas_call(
        kernel2,
        grid=(1,),
        in_specs=[
            pl.BlockSpec((n_pad, H_out), lambda t: (0, 0)),
            pl.BlockSpec((1, H_out), lambda t: (0, 0)),
            pl.BlockSpec((1, H_out), lambda t: (0, 0)),
        ],
        out_specs=pl.BlockSpec((n_pad, H_out), lambda t: (0, 0)),
        out_shape=jax.ShapeDtypeStruct((n_pad, H_out), jnp.float32),
    )(y,
      jnp.asarray(gamma, jnp.float32).reshape(1, H_out),
      jnp.asarray(beta, jnp.float32).reshape(1, H_out))

    return out[:N]


# ----------------------------------------------------------------------------
# NumPy reference that follows the torch code literally (scatter_add based).
# ----------------------------------------------------------------------------
def _reference(h_states, seq_start_end, end_pos, params, *,
               h_dim, grid_size, neighborhood_size):
    w, b, gamma, beta = (np.asarray(p, np.float64) for p in params)
    hs = np.asarray(h_states, np.float64).reshape(-1, h_dim)
    ep = np.asarray(end_pos, np.float64)
    ns = neighborhood_size
    G2 = grid_size * grid_size
    pool_list = []
    for (start, end) in seq_start_end:
        start, end = int(start), int(end)
        P = end - start
        curr_hidden = hs[start:end]
        curr_hidden_repeat = np.tile(curr_hidden, (P, 1))          # row r=i*P+j -> hidden[j]
        cp = ep[start:end]
        tl = np.stack([cp[:, 0] - ns / 2, cp[:, 1] + ns / 2], 1)
        br = np.stack([cp[:, 0] + ns / 2, cp[:, 1] - ns / 2], 1)
        cp_rep = np.tile(cp, (P, 1))                               # pos[j]
        tl_rep = np.repeat(tl, P, axis=0)                          # bounds[i]
        br_rep = np.repeat(br, P, axis=0)
        cell_x = np.floor((cp_rep[:, 0] - tl_rep[:, 0]) / ns * grid_size)
        cell_y = np.floor((tl_rep[:, 1] - cp_rep[:, 1]) / ns * grid_size)
        grid_pos = (cell_x + cell_y * grid_size).astype(np.int64)
        x_b = (cp_rep[:, 0] >= br_rep[:, 0]) | (cp_rep[:, 0] <= tl_rep[:, 0])
        y_b = (cp_rep[:, 1] >= tl_rep[:, 1]) | (cp_rep[:, 1] <= br_rep[:, 1])
        within_bound = x_b.astype(np.int64) + y_b.astype(np.int64)
        within_bound[0::P + 1] = 1
        grid_pos = grid_pos + 1
        offset = np.repeat(np.arange(0, G2 * P, G2), P)
        grid_pos = grid_pos + offset
        grid_pos[within_bound != 0] = 0
        curr_pool = np.zeros((P * G2 + 1, h_dim), dtype=np.float64)
        np.add.at(curr_pool, grid_pos, curr_hidden_repeat)
        pool_list.append(curr_pool[1:].reshape(P, -1))
    pool = np.concatenate(pool_list, 0)
    y = pool @ w + b
    mean = y.mean(0)
    var = y.var(0)
    y = (y - mean) / np.sqrt(var + _BN_EPS) * gamma + beta
    return np.maximum(y, 0.0)


if __name__ == "__main__":
    H_DIM = 16
    GRID = 4
    NS = 2.0
    seq_start_end = [(0, 4), (4, 10)]      # two ragged sequences (4 and 6 peds)
    N = 10
    D = GRID * GRID * H_DIM                # 256 = grid_size**2 * h_dim

    key = jax.random.PRNGKey(0)
    k1, k2, k3, k4, k5, k6 = jax.random.split(key, 6)
    h_states = jax.random.normal(k1, (1, N, H_DIM), dtype=jnp.float32)
    end_pos = jax.random.uniform(k2, (N, 2), minval=-1.0, maxval=1.0,
                                 dtype=jnp.float32)
    # mlp_pool parameters: Linear(D -> H_DIM) (weight stored as (in, out)),
    # BatchNorm1d(H_DIM) affine params. Deterministic synthetic init.
    w = 0.05 * jax.random.normal(k3, (D, H_DIM), dtype=jnp.float32)
    b = 0.05 * jax.random.normal(k4, (H_DIM,), dtype=jnp.float32)
    gamma = 1.0 + 0.1 * jax.random.normal(k5, (H_DIM,), dtype=jnp.float32)
    beta = 0.1 * jax.random.normal(k6, (H_DIM,), dtype=jnp.float32)
    params = (w, b, gamma, beta)

    out = social_pooling_forward(h_states, seq_start_end, end_pos, params,
                                 h_dim=H_DIM, grid_size=GRID,
                                 neighborhood_size=NS)
    out = jax.block_until_ready(out)

    ref = _reference(h_states, seq_start_end, end_pos, params,
                     h_dim=H_DIM, grid_size=GRID, neighborhood_size=NS)

    assert out.shape == (N, H_DIM), out.shape
    assert np.allclose(np.asarray(out, np.float64), ref, atol=5e-2, rtol=5e-2), (
        "mismatch vs reference:\n%s\n%s" % (np.asarray(out), ref))
    print("KERNEL_OK")
</pallas_src>

<mosaic_0001>
module attributes {stable_mosaic.version = 11 : i64} {
  func.func @_pool_linear_kernel(%arg0: i32, %arg1: memref<16x3xf32, #tpu.memory_space<vmem>>, %arg2: memref<3x16xf32, #tpu.memory_space<vmem>>, %arg3: memref<16x16x16xbf16, #tpu.memory_space<vmem>>, %arg4: memref<1x16xf32, #tpu.memory_space<vmem>>, %arg5: memref<16x16xf32, #tpu.memory_space<vmem>>) attributes {dimension_semantics = [#tpu.dimension_semantics<parallel>], iteration_bounds = array<i64: 1>, scalar_prefetch = 0 : i64, scratch_operands = 0 : i64, tpu.core_type = #tpu.core_type<tc>, window_params = [{transform_indices = @transform_0, window_bounds = array<i64: 16, 3>}, {pipeline_mode = #tpu.pipeline_mode<synchronous>, transform_indices = @transform_1, window_bounds = array<i64: 3, 16>}, {pipeline_mode = #tpu.pipeline_mode<synchronous>, transform_indices = @transform_2, window_bounds = array<i64: 16, 16, 16>}, {pipeline_mode = #tpu.pipeline_mode<synchronous>, transform_indices = @transform_3, window_bounds = array<i64: 1, 16>}, {transform_indices = @transform_4, window_bounds = array<i64: 16, 16>}]} {
    %c16_i32 = arith.constant 16 : i32
    %0 = arith.muli %arg0, %c16_i32 : i32
    %1 = tpu.assume_multiple %0, 16 : i32
    %c0 = arith.constant 0 : index
    %c0_0 = arith.constant 0 : index
    %2 = vector.load %arg1[%c0, %c0_0] : memref<16x3xf32, #tpu.memory_space<vmem>>, vector<16x3xf32>
    %3 = vector.extract_strided_slice %2 {offsets = [0, 0], sizes = [16, 1], strides = [1, 1]} : vector<16x3xf32> to vector<16x1xf32>
    %4 = vector.extract_strided_slice %2 {offsets = [0, 1], sizes = [16, 1], strides = [1, 1]} : vector<16x3xf32> to vector<16x1xf32>
    %5 = vector.extract_strided_slice %2 {offsets = [0, 2], sizes = [16, 1], strides = [1, 1]} : vector<16x3xf32> to vector<16x1xf32>
    %c0_1 = arith.constant 0 : index
    %c0_2 = arith.constant 0 : index
    %6 = vector.load %arg2[%c0_1, %c0_2] : memref<3x16xf32, #tpu.memory_space<vmem>>, vector<1x16xf32>
    %c1 = arith.constant 1 : index
    %c0_3 = arith.constant 0 : index
    %7 = vector.load %arg2[%c1, %c0_3] : memref<3x16xf32, #tpu.memory_space<vmem>>, vector<1x16xf32>
    %c2 = arith.constant 2 : index
    %c0_4 = arith.constant 0 : index
    %8 = vector.load %arg2[%c2, %c0_4] : memref<3x16xf32, #tpu.memory_space<vmem>>, vector<1x16xf32>
    %cst = arith.constant 1.000000e+00 : f32
    %9 = vector.broadcast %cst : f32 to vector<16x1xf32>
    %10 = arith.subf %3, %9 : vector<16x1xf32>
    %cst_5 = arith.constant 1.000000e+00 : f32
    %11 = vector.broadcast %cst_5 : f32 to vector<16x1xf32>
    %12 = arith.addf %4, %11 : vector<16x1xf32>
    %cst_6 = arith.constant 1.000000e+00 : f32
    %13 = vector.broadcast %cst_6 : f32 to vector<16x1xf32>
    %14 = arith.addf %3, %13 : vector<16x1xf32>
    %cst_7 = arith.constant 1.000000e+00 : f32
    %15 = vector.broadcast %cst_7 : f32 to vector<16x1xf32>
    %16 = arith.subf %4, %15 : vector<16x1xf32>
    %17 = vector.broadcast %6 : vector<1x16xf32> to vector<16x16xf32>
    %18 = vector.broadcast %10 : vector<16x1xf32> to vector<16x16xf32>
    %19 = arith.subf %17, %18 : vector<16x16xf32>
    %cst_8 = arith.constant 2.000000e+00 : f32
    %20 = vector.broadcast %cst_8 : f32 to vector<16x16xf32>
    %21 = arith.divf %19, %20 : vector<16x16xf32>
    %cst_9 = arith.constant 4.000000e+00 : f32
    %22 = vector.broadcast %cst_9 : f32 to vector<16x16xf32>
    %23 = arith.mulf %21, %22 : vector<16x16xf32>
    %24 = math.floor %23 : vector<16x16xf32>
    %25 = vector.broadcast %12 : vector<16x1xf32> to vector<16x16xf32>
    %26 = vector.broadcast %7 : vector<1x16xf32> to vector<16x16xf32>
    %27 = arith.subf %25, %26 : vector<16x16xf32>
    %cst_10 = arith.constant 2.000000e+00 : f32
    %28 = vector.broadcast %cst_10 : f32 to vector<16x16xf32>
    %29 = arith.divf %27, %28 : vector<16x16xf32>
    %cst_11 = arith.constant 4.000000e+00 : f32
    %30 = vector.broadcast %cst_11 : f32 to vector<16x16xf32>
    %31 = arith.mulf %29, %30 : vector<16x16xf32>
    %32 = math.floor %31 : vector<16x16xf32>
    %cst_12 = arith.constant 4.000000e+00 : f32
    %33 = vector.broadcast %cst_12 : f32 to vector<16x16xf32>
    %34 = arith.mulf %32, %33 : vector<16x16xf32>
    %35 = arith.addf %24, %34 : vector<16x16xf32>
    %36 = arith.fptosi %35 : vector<16x16xf32> to vector<16x16xi32>
    %37 = vector.broadcast %6 : vector<1x16xf32> to vector<16x16xf32>
    %38 = vector.broadcast %14 : vector<16x1xf32> to vector<16x16xf32>
    %39 = arith.cmpf oge, %37, %38 : vector<16x16xf32>
    %40 = vector.broadcast %6 : vector<1x16xf32> to vector<16x16xf32>
    %41 = vector.broadcast %10 : vector<16x1xf32> to vector<16x16xf32>
    %42 = arith.cmpf ole, %40, %41 : vector<16x16xf32>
    %43 = arith.ori %39, %42 : vector<16x16xi1>
    %44 = vector.broadcast %7 : vector<1x16xf32> to vector<16x16xf32>
    %45 = vector.broadcast %12 : vector<16x1xf32> to vector<16x16xf32>
    %46 = arith.cmpf oge, %44, %45 : vector<16x16xf32>
    %47 = arith.ori %43, %46 : vector<16x16xi1>
    %48 = vector.broadcast %7 : vector<1x16xf32> to vector<16x16xf32>
    %49 = vector.broadcast %16 : vector<16x1xf32> to vector<16x16xf32>
    %50 = arith.cmpf ole, %48, %49 : vector<16x16xf32>
    %51 = arith.ori %47, %50 : vector<16x16xi1>
    %52 = tpu.iota {dimensions = array<i32: 0>} : vector<16x16xi32>
    %53 = vector.broadcast %1 : i32 to vector<16x16xi32>
    %54 = arith.addi %53, %52 : vector<16x16xi32>
    %55 = tpu.iota {dimensions = array<i32: 1>} : vector<16x16xi32>
    %56 = vector.broadcast %5 : vector<16x1xf32> to vector<16x16xf32>
    %57 = vector.broadcast %8 : vector<1x16xf32> to vector<16x16xf32>
    %58 = arith.cmpf oeq, %56, %57 : vector<16x16xf32>
    %cst_13 = arith.constant dense<true> : vector<16x16xi1>
    %59 = arith.xori %51, %cst_13 : vector<16x16xi1>
    %60 = arith.andi %58, %59 : vector<16x16xi1>
    %61 = arith.cmpi ne, %54, %55 : vector<16x16xi32>
    %62 = arith.andi %60, %61 : vector<16x16xi1>
    %c0_i32 = arith.constant 0 : i32
    %63 = vector.broadcast %c0_i32 : i32 to vector<16x16xi32>
    %64 = arith.cmpi sge, %36, %63 : vector<16x16xi32>
    %65 = arith.andi %62, %64 : vector<16x16xi1>
    %c16_i32_14 = arith.constant 16 : i32
    %66 = vector.broadcast %c16_i32_14 : i32 to vector<16x16xi32>
    %67 = arith.cmpi slt, %36, %66 : vector<16x16xi32>
    %68 = arith.andi %65, %67 : vector<16x16xi1>
    %c-1_i32 = arith.constant -1 : i32
    %69 = vector.broadcast %c-1_i32 : i32 to vector<16x16xi32>
    %70 = arith.select %68, %36, %69 : vector<16x16xi1>, vector<16x16xi32>
    %cst_15 = arith.constant 0.000000e+00 : f32
    %71 = vector.broadcast %cst_15 : f32 to vector<16x16xf32>
    %c0_i32_16 = arith.constant 0 : i32
    %72 = vector.broadcast %c0_i32_16 : i32 to vector<16x16xi32>
    %73 = arith.cmpi eq, %70, %72 : vector<16x16xi32>
    %74 = arith.extui %73 : vector<16x16xi1> to vector<16x16xi32>
    %75 = arith.sitofp %74 : vector<16x16xi32> to vector<16x16xf32>
    %76 = arith.truncf %75 : vector<16x16xf32> to vector<16x16xbf16>
    %c0_17 = arith.constant 0 : index
    %c0_18 = arith.constant 0 : index
    %c0_19 = arith.constant 0 : index
    %77 = vector.load %arg3[%c0_17, %c0_18, %c0_19] : memref<16x16x16xbf16, #tpu.memory_space<vmem>>, vector<1x16x16xbf16>
    %78 = vector.shape_cast %77 : vector<1x16x16xbf16> to vector<16x16xbf16>
    %cst_20 = arith.constant dense<0.000000e+00> : vector<16x16xf32>
    %79 = tpu.matmul %76, %78, %cst_20 {dimension_numbers = #tpu.dot_dimension_numbers<[1], [0], [0], [1], [0, 0, 1, 1], [], []>} : vector<16x16xbf16>, vector<16x16xbf16>, vector<16x16xf32> -> vector<16x16xf32>
    %80 = arith.addf %71, %79 : vector<16x16xf32>
    %c1_i32 = arith.constant 1 : i32
    %81 = vector.broadcast %c1_i32 : i32 to vector<16x16xi32>
    %82 = arith.cmpi eq, %70, %81 : vector<16x16xi32>
    %83 = arith.extui %82 : vector<16x16xi1> to vector<16x16xi32>
    %84 = arith.sitofp %83 : vector<16x16xi32> to vector<16x16xf32>
    %85 = arith.truncf %84 : vector<16x16xf32> to vector<16x16xbf16>
    %c1_21 = arith.constant 1 : index
    %c0_22 = arith.constant 0 : index
    %c0_23 = arith.constant 0 : index
    %86 = vector.load %arg3[%c1_21, %c0_22, %c0_23] : memref<16x16x16xbf16, #tpu.memory_space<vmem>>, vector<1x16x16xbf16>
    %87 = vector.shape_cast %86 : vector<1x16x16xbf16> to vector<16x16xbf16>
    %cst_24 = arith.constant dense<0.000000e+00> : vector<16x16xf32>
    %88 = tpu.matmul %85, %87, %cst_24 {dimension_numbers = #tpu.dot_dimension_numbers<[1], [0], [0], [1], [0, 0, 1, 1], [], []>} : vector<16x16xbf16>, vector<16x16xbf16>, vector<16x16xf32> -> vector<16x16xf32>
    %89 = arith.addf %80, %88 : vector<16x16xf32>
    %c2_i32 = arith.constant 2 : i32
    %90 = vector.broadcast %c2_i32 : i32 to vector<16x16xi32>
    %91 = arith.cmpi eq, %70, %90 : vector<16x16xi32>
    %92 = arith.extui %91 : vector<16x16xi1> to vector<16x16xi32>
    %93 = arith.sitofp %92 : vector<16x16xi32> to vector<16x16xf32>
    %94 = arith.truncf %93 : vector<16x16xf32> to vector<16x16xbf16>
    %c2_25 = arith.constant 2 : index
    %c0_26 = arith.constant 0 : index
    %c0_27 = arith.constant 0 : index
    %95 = vector.load %arg3[%c2_25, %c0_26, %c0_27] : memref<16x16x16xbf16, #tpu.memory_space<vmem>>, vector<1x16x16xbf16>
    %96 = vector.shape_cast %95 : vector<1x16x16xbf16> to vector<16x16xbf16>
    %cst_28 = arith.constant dense<0.000000e+00> : vector<16x16xf32>
    %97 = tpu.matmul %94, %96, %cst_28 {dimension_numbers = #tpu.dot_dimension_numbers<[1], [0], [0], [1], [0, 0, 1, 1], [], []>} : vector<16x16xbf16>, vector<16x16xbf16>, vector<16x16xf32> -> vector<16x16xf32>
    %98 = arith.addf %89, %97 : vector<16x16xf32>
    %c3_i32 = arith.constant 3 : i32
    %99 = vector.broadcast %c3_i32 : i32 to vector<16x16xi32>
    %100 = arith.cmpi eq, %70, %99 : vector<16x16xi32>
    %101 = arith.extui %100 : vector<16x16xi1> to vector<16x16xi32>
    %102 = arith.sitofp %101 : vector<16x16xi32> to vector<16x16xf32>
    %103 = arith.truncf %102 : vector<16x16xf32> to vector<16x16xbf16>
    %c3 = arith.constant 3 : index
    %c0_29 = arith.constant 0 : index
    %c0_30 = arith.constant 0 : index
    %104 = vector.load %arg3[%c3, %c0_29, %c0_30] : memref<16x16x16xbf16, #tpu.memory_space<vmem>>, vector<1x16x16xbf16>
    %105 = vector.shape_cast %104 : vector<1x16x16xbf16> to vector<16x16xbf16>
    %cst_31 = arith.constant dense<0.000000e+00> : vector<16x16xf32>
    %106 = tpu.matmul %103, %105, %cst_31 {dimension_numbers = #tpu.dot_dimension_numbers<[1], [0], [0], [1], [0, 0, 1, 1], [], []>} : vector<16x16xbf16>, vector<16x16xbf16>, vector<16x16xf32> -> vector<16x16xf32>
    %107 = arith.addf %98, %106 : vector<16x16xf32>
    %c4_i32 = arith.constant 4 : i32
    %108 = vector.broadcast %c4_i32 : i32 to vector<16x16xi32>
    %109 = arith.cmpi eq, %70, %108 : vector<16x16xi32>
    %110 = arith.extui %109 : vector<16x16xi1> to vector<16x16xi32>
    %111 = arith.sitofp %110 : vector<16x16xi32> to vector<16x16xf32>
    %112 = arith.truncf %111 : vector<16x16xf32> to vector<16x16xbf16>
    %c4 = arith.constant 4 : index
    %c0_32 = arith.constant 0 : index
    %c0_33 = arith.constant 0 : index
    %113 = vector.load %arg3[%c4, %c0_32, %c0_33] : memref<16x16x16xbf16, #tpu.memory_space<vmem>>, vector<1x16x16xbf16>
    %114 = vector.shape_cast %113 : vector<1x16x16xbf16> to vector<16x16xbf16>
    %cst_34 = arith.constant dense<0.000000e+00> : vector<16x16xf32>
    %115 = tpu.matmul %112, %114, %cst_34 {dimension_numbers = #tpu.dot_dimension_numbers<[1], [0], [0], [1], [0, 0, 1, 1], [], []>} : vector<16x16xbf16>, vector<16x16xbf16>, vector<16x16xf32> -> vector<16x16xf32>
    %116 = arith.addf %107, %115 : vector<16x16xf32>
    %c5_i32 = arith.constant 5 : i32
    %117 = vector.broadcast %c5_i32 : i32 to vector<16x16xi32>
    %118 = arith.cmpi eq, %70, %117 : vector<16x16xi32>
    %119 = arith.extui %118 : vector<16x16xi1> to vector<16x16xi32>
    %120 = arith.sitofp %119 : vector<16x16xi32> to vector<16x16xf32>
    %121 = arith.truncf %120 : vector<16x16xf32> to vector<16x16xbf16>
    %c5 = arith.constant 5 : index
    %c0_35 = arith.constant 0 : index
    %c0_36 = arith.constant 0 : index
    %122 = vector.load %arg3[%c5, %c0_35, %c0_36] : memref<16x16x16xbf16, #tpu.memory_space<vmem>>, vector<1x16x16xbf16>
    %123 = vector.shape_cast %122 : vector<1x16x16xbf16> to vector<16x16xbf16>
    %cst_37 = arith.constant dense<0.000000e+00> : vector<16x16xf32>
    %124 = tpu.matmul %121, %123, %cst_37 {dimension_numbers = #tpu.dot_dimension_numbers<[1], [0], [0], [1], [0, 0, 1, 1], [], []>} : vector<16x16xbf16>, vector<16x16xbf16>, vector<16x16xf32> -> vector<16x16xf32>
    %125 = arith.addf %116, %124 : vector<16x16xf32>
    %c6_i32 = arith.constant 6 : i32
    %126 = vector.broadcast %c6_i32 : i32 to vector<16x16xi32>
    %127 = arith.cmpi eq, %70, %126 : vector<16x16xi32>
    %128 = arith.extui %127 : vector<16x16xi1> to vector<16x16xi32>
    %129 = arith.sitofp %128 : vector<16x16xi32> to vector<16x16xf32>
    %130 = arith.truncf %129 : vector<16x16xf32> to vector<16x16xbf16>
    %c6 = arith.constant 6 : index
    %c0_38 = arith.constant 0 : index
    %c0_39 = arith.constant 0 : index
    %131 = vector.load %arg3[%c6, %c0_38, %c0_39] : memref<16x16x16xbf16, #tpu.memory_space<vmem>>, vector<1x16x16xbf16>
    %132 = vector.shape_cast %131 : vector<1x16x16xbf16> to vector<16x16xbf16>
    %cst_40 = arith.constant dense<0.000000e+00> : vector<16x16xf32>
    %133 = tpu.matmul %130, %132, %cst_40 {dimension_numbers = #tpu.dot_dimension_numbers<[1], [0], [0], [1], [0, 0, 1, 1], [], []>} : vector<16x16xbf16>, vector<16x16xbf16>, vector<16x16xf32> -> vector<16x16xf32>
    %134 = arith.addf %125, %133 : vector<16x16xf32>
    %c7_i32 = arith.constant 7 : i32
    %135 = vector.broadcast %c7_i32 : i32 to vector<16x16xi32>
    %136 = arith.cmpi eq, %70, %135 : vector<16x16xi32>
    %137 = arith.extui %136 : vector<16x16xi1> to vector<16x16xi32>
    %138 = arith.sitofp %137 : vector<16x16xi32> to vector<16x16xf32>
    %139 = arith.truncf %138 : vector<16x16xf32> to vector<16x16xbf16>
    %c7 = arith.constant 7 : index
    %c0_41 = arith.constant 0 : index
    %c0_42 = arith.constant 0 : index
    %140 = vector.load %arg3[%c7, %c0_41, %c0_42] : memref<16x16x16xbf16, #tpu.memory_space<vmem>>, vector<1x16x16xbf16>
    %141 = vector.shape_cast %140 : vector<1x16x16xbf16> to vector<16x16xbf16>
    %cst_43 = arith.constant dense<0.000000e+00> : vector<16x16xf32>
    %142 = tpu.matmul %139, %141, %cst_43 {dimension_numbers = #tpu.dot_dimension_numbers<[1], [0], [0], [1], [0, 0, 1, 1], [], []>} : vector<16x16xbf16>, vector<16x16xbf16>, vector<16x16xf32> -> vector<16x16xf32>
    %143 = arith.addf %134, %142 : vector<16x16xf32>
    %c8_i32 = arith.constant 8 : i32
    %144 = vector.broadcast %c8_i32 : i32 to vector<16x16xi32>
    %145 = arith.cmpi eq, %70, %144 : vector<16x16xi32>
    %146 = arith.extui %145 : vector<16x16xi1> to vector<16x16xi32>
    %147 = arith.sitofp %146 : vector<16x16xi32> to vector<16x16xf32>
    %148 = arith.truncf %147 : vector<16x16xf32> to vector<16x16xbf16>
    %c8 = arith.constant 8 : index
    %c0_44 = arith.constant 0 : index
    %c0_45 = arith.constant 0 : index
    %149 = vector.load %arg3[%c8, %c0_44, %c0_45] : memref<16x16x16xbf16, #tpu.memory_space<vmem>>, vector<1x16x16xbf16>
    %150 = vector.shape_cast %149 : vector<1x16x16xbf16> to vector<16x16xbf16>
    %cst_46 = arith.constant dense<0.000000e+00> : vector<16x16xf32>
    %151 = tpu.matmul %148, %150, %cst_46 {dimension_numbers = #tpu.dot_dimension_numbers<[1], [0], [0], [1], [0, 0, 1, 1], [], []>} : vector<16x16xbf16>, vector<16x16xbf16>, vector<16x16xf32> -> vector<16x16xf32>
    %152 = arith.addf %143, %151 : vector<16x16xf32>
    %c9_i32 = arith.constant 9 : i32
    %153 = vector.broadcast %c9_i32 : i32 to vector<16x16xi32>
    %154 = arith.cmpi eq, %70, %153 : vector<16x16xi32>
    %155 = arith.extui %154 : vector<16x16xi1> to vector<16x16xi32>
    %156 = arith.sitofp %155 : vector<16x16xi32> to vector<16x16xf32>
    %157 = arith.truncf %156 : vector<16x16xf32> to vector<16x16xbf16>
    %c9 = arith.constant 9 : index
    %c0_47 = arith.constant 0 : index
    %c0_48 = arith.constant 0 : index
    %158 = vector.load %arg3[%c9, %c0_47, %c0_48] : memref<16x16x16xbf16, #tpu.memory_space<vmem>>, vector<1x16x16xbf16>
    %159 = vector.shape_cast %158 : vector<1x16x16xbf16> to vector<16x16xbf16>
    %cst_49 = arith.constant dense<0.000000e+00> : vector<16x16xf32>
    %160 = tpu.matmul %157, %159, %cst_49 {dimension_numbers = #tpu.dot_dimension_numbers<[1], [0], [0], [1], [0, 0, 1, 1], [], []>} : vector<16x16xbf16>, vector<16x16xbf16>, vector<16x16xf32> -> vector<16x16xf32>
    %161 = arith.addf %152, %160 : vector<16x16xf32>
    %c10_i32 = arith.constant 10 : i32
    %162 = vector.broadcast %c10_i32 : i32 to vector<16x16xi32>
    %163 = arith.cmpi eq, %70, %162 : vector<16x16xi32>
    %164 = arith.extui %163 : vector<16x16xi1> to vector<16x16xi32>
    %165 = arith.sitofp %164 : vector<16x16xi32> to vector<16x16xf32>
    %166 = arith.truncf %165 : vector<16x16xf32> to vector<16x16xbf16>
    %c10 = arith.constant 10 : index
    %c0_50 = arith.constant 0 : index
    %c0_51 = arith.constant 0 : index
    %167 = vector.load %arg3[%c10, %c0_50, %c0_51] : memref<16x16x16xbf16, #tpu.memory_space<vmem>>, vector<1x16x16xbf16>
    %168 = vector.shape_cast %167 : vector<1x16x16xbf16> to vector<16x16xbf16>
    %cst_52 = arith.constant dense<0.000000e+00> : vector<16x16xf32>
    %169 = tpu.matmul %166, %168, %cst_52 {dimension_numbers = #tpu.dot_dimension_numbers<[1], [0], [0], [1], [0, 0, 1, 1], [], []>} : vector<16x16xbf16>, vector<16x16xbf16>, vector<16x16xf32> -> vector<16x16xf32>
    %170 = arith.addf %161, %169 : vector<16x16xf32>
    %c11_i32 = arith.constant 11 : i32
    %171 = vector.broadcast %c11_i32 : i32 to vector<16x16xi32>
    %172 = arith.cmpi eq, %70, %171 : vector<16x16xi32>
    %173 = arith.extui %172 : vector<16x16xi1> to vector<16x16xi32>
    %174 = arith.sitofp %173 : vector<16x16xi32> to vector<16x16xf32>
    %175 = arith.truncf %174 : vector<16x16xf32> to vector<16x16xbf16>
    %c11 = arith.constant 11 : index
    %c0_53 = arith.constant 0 : index
    %c0_54 = arith.constant 0 : index
    %176 = vector.load %arg3[%c11, %c0_53, %c0_54] : memref<16x16x16xbf16, #tpu.memory_space<vmem>>, vector<1x16x16xbf16>
    %177 = vector.shape_cast %176 : vector<1x16x16xbf16> to vector<16x16xbf16>
    %cst_55 = arith.constant dense<0.000000e+00> : vector<16x16xf32>
    %178 = tpu.matmul %175, %177, %cst_55 {dimension_numbers = #tpu.dot_dimension_numbers<[1], [0], [0], [1], [0, 0, 1, 1], [], []>} : vector<16x16xbf16>, vector<16x16xbf16>, vector<16x16xf32> -> vector<16x16xf32>
    %179 = arith.addf %170, %178 : vector<16x16xf32>
    %c12_i32 = arith.constant 12 : i32
    %180 = vector.broadcast %c12_i32 : i32 to vector<16x16xi32>
    %181 = arith.cmpi eq, %70, %180 : vector<16x16xi32>
    %182 = arith.extui %181 : vector<16x16xi1> to vector<16x16xi32>
    %183 = arith.sitofp %182 : vector<16x16xi32> to vector<16x16xf32>
    %184 = arith.truncf %183 : vector<16x16xf32> to vector<16x16xbf16>
    %c12 = arith.constant 12 : index
    %c0_56 = arith.constant 0 : index
    %c0_57 = arith.constant 0 : index
    %185 = vector.load %arg3[%c12, %c0_56, %c0_57] : memref<16x16x16xbf16, #tpu.memory_space<vmem>>, vector<1x16x16xbf16>
    %186 = vector.shape_cast %185 : vector<1x16x16xbf16> to vector<16x16xbf16>
    %cst_58 = arith.constant dense<0.000000e+00> : vector<16x16xf32>
    %187 = tpu.matmul %184, %186, %cst_58 {dimension_numbers = #tpu.dot_dimension_numbers<[1], [0], [0], [1], [0, 0, 1, 1], [], []>} : vector<16x16xbf16>, vector<16x16xbf16>, vector<16x16xf32> -> vector<16x16xf32>
    %188 = arith.addf %179, %187 : vector<16x16xf32>
    %c13_i32 = arith.constant 13 : i32
    %189 = vector.broadcast %c13_i32 : i32 to vector<16x16xi32>
    %190 = arith.cmpi eq, %70, %189 : vector<16x16xi32>
    %191 = arith.extui %190 : vector<16x16xi1> to vector<16x16xi32>
    %192 = arith.sitofp %191 : vector<16x16xi32> to vector<16x16xf32>
    %193 = arith.truncf %192 : vector<16x16xf32> to vector<16x16xbf16>
    %c13 = arith.constant 13 : index
    %c0_59 = arith.constant 0 : index
    %c0_60 = arith.constant 0 : index
    %194 = vector.load %arg3[%c13, %c0_59, %c0_60] : memref<16x16x16xbf16, #tpu.memory_space<vmem>>, vector<1x16x16xbf16>
    %195 = vector.shape_cast %194 : vector<1x16x16xbf16> to vector<16x16xbf16>
    %cst_61 = arith.constant dense<0.000000e+00> : vector<16x16xf32>
    %196 = tpu.matmul %193, %195, %cst_61 {dimension_numbers = #tpu.dot_dimension_numbers<[1], [0], [0], [1], [0, 0, 1, 1], [], []>} : vector<16x16xbf16>, vector<16x16xbf16>, vector<16x16xf32> -> vector<16x16xf32>
    %197 = arith.addf %188, %196 : vector<16x16xf32>
    %c14_i32 = arith.constant 14 : i32
    %198 = vector.broadcast %c14_i32 : i32 to vector<16x16xi32>
    %199 = arith.cmpi eq, %70, %198 : vector<16x16xi32>
    %200 = arith.extui %199 : vector<16x16xi1> to vector<16x16xi32>
    %201 = arith.sitofp %200 : vector<16x16xi32> to vector<16x16xf32>
    %202 = arith.truncf %201 : vector<16x16xf32> to vector<16x16xbf16>
    %c14 = arith.constant 14 : index
    %c0_62 = arith.constant 0 : index
    %c0_63 = arith.constant 0 : index
    %203 = vector.load %arg3[%c14, %c0_62, %c0_63] : memref<16x16x16xbf16, #tpu.memory_space<vmem>>, vector<1x16x16xbf16>
    %204 = vector.shape_cast %203 : vector<1x16x16xbf16> to vector<16x16xbf16>
    %cst_64 = arith.constant dense<0.000000e+00> : vector<16x16xf32>
    %205 = tpu.matmul %202, %204, %cst_64 {dimension_numbers = #tpu.dot_dimension_numbers<[1], [0], [0], [1], [0, 0, 1, 1], [], []>} : vector<16x16xbf16>, vector<16x16xbf16>, vector<16x16xf32> -> vector<16x16xf32>
    %206 = arith.addf %197, %205 : vector<16x16xf32>
    %c15_i32 = arith.constant 15 : i32
    %207 = vector.broadcast %c15_i32 : i32 to vector<16x16xi32>
    %208 = arith.cmpi eq, %70, %207 : vector<16x16xi32>
    %209 = arith.extui %208 : vector<16x16xi1> to vector<16x16xi32>
    %210 = arith.sitofp %209 : vector<16x16xi32> to vector<16x16xf32>
    %211 = arith.truncf %210 : vector<16x16xf32> to vector<16x16xbf16>
    %c15 = arith.constant 15 : index
    %c0_65 = arith.constant 0 : index
    %c0_66 = arith.constant 0 : index
    %212 = vector.load %arg3[%c15, %c0_65, %c0_66] : memref<16x16x16xbf16, #tpu.memory_space<vmem>>, vector<1x16x16xbf16>
    %213 = vector.shape_cast %212 : vector<1x16x16xbf16> to vector<16x16xbf16>
    %cst_67 = arith.constant dense<0.000000e+00> : vector<16x16xf32>
    %214 = tpu.matmul %211, %213, %cst_67 {dimension_numbers = #tpu.dot_dimension_numbers<[1], [0], [0], [1], [0, 0, 1, 1], [], []>} : vector<16x16xbf16>, vector<16x16xbf16>, vector<16x16xf32> -> vector<16x16xf32>
    %215 = arith.addf %206, %214 : vector<16x16xf32>
    %c0_68 = arith.constant 0 : index
    %c0_69 = arith.constant 0 : index
    %216 = vector.load %arg4[%c0_68, %c0_69] : memref<1x16xf32, #tpu.memory_space<vmem>>, vector<1x16xf32>
    %217 = vector.broadcast %216 : vector<1x16xf32> to vector<16x16xf32>
    %218 = arith.addf %215, %217 : vector<16x16xf32>
    %c0_70 = arith.constant 0 : index
    %c0_71 = arith.constant 0 : index
    %219 = vector.load %arg5[%c0_70, %c0_71] : memref<16x16xf32, #tpu.memory_space<vmem>>, vector<16x16xf32>
    tpu.vector_store %arg5[%c0_70, %c0_71], %218 {strides = array<i32>} : memref<16x16xf32, #tpu.memory_space<vmem>>, vector<16x16xf32>,
    return
  }
  func.func @transform_0(%arg0: i32) -> (i32, i32) {
    %c0_i32 = arith.constant 0 : i32
    %c0_i32_0 = arith.constant 0 : i32
    return %arg0, %c0_i32 : i32, i32
  }
  func.func @transform_1(%arg0: i32) -> (i32, i32) {
    %c0_i32 = arith.constant 0 : i32
    %c0_i32_0 = arith.constant 0 : i32
    %c0_i32_1 = arith.constant 0 : i32
    return %c0_i32, %c0_i32_0 : i32, i32
  }
  func.func @transform_2(%arg0: i32) -> (i32, i32, i32) {
    %c0_i32 = arith.constant 0 : i32
    %c0_i32_0 = arith.constant 0 : i32
    %c0_i32_1 = arith.constant 0 : i32
    %c0_i32_2 = arith.constant 0 : i32
    return %c0_i32, %c0_i32_0, %c0_i32_1 : i32, i32, i32
  }
  func.func @transform_3(%arg0: i32) -> (i32, i32) {
    %c0_i32 = arith.constant 0 : i32
    %c0_i32_0 = arith.constant 0 : i32
    %c0_i32_1 = arith.constant 0 : i32
    return %c0_i32, %c0_i32_0 : i32, i32
  }
  func.func @transform_4(%arg0: i32) -> (i32, i32) {
    %c0_i32 = arith.constant 0 : i32
    %c0_i32_0 = arith.constant 0 : i32
    return %arg0, %c0_i32 : i32, i32
  }
}

</mosaic_0001>

<llo_original>
// kernel: tpu_custom_call.1
$region0: #{tpu_custom_call.1}
  #allocation0 [shape = 'u32[]', space=smem, size = 0x4, offset = 0x4, fixed_abs, tag = 'smem constant byte address 0x4 - core index']
  #allocation1 [shape = 'u32[72,128]{1,0:T(1,128)}', space=vmem, size = 0x9000, scoped, tag = 'internal scratch']
  %s0 = inlined_call_operand.vmem [shape: f32[16,3], index: 0, kind: input, shape index: {}]
  %s1 = inlined_call_operand.vmem [shape: f32[3,16], index: 1, kind: input, shape index: {}]
  %s2 = inlined_call_operand.hbm [shape: bf16[16,16,16], index: 2, kind: input, shape index: {}]
  %s3 = inlined_call_operand.vmem [shape: f32[1,16], index: 3, kind: input, shape index: {}]
  %s4 = inlined_call_operand.hbm [shape: f32[16,16], index: 4, kind: output, shape index: {}]
  %s5 = sld [smem:[#allocation0]]
  $region30: #{tpu_custom_call.1} parent=0
    _
  %s7 = ssub.s32 1, %s5
  %s8 = scalar_select 0, %s7, %s5
  $region1: #{tpu_custom_call.1} parent=0
    #allocation2 [shape = 'u8[65536]{0}', space=vmem, size = 0x10000, scoped, tag = 'input window, operand 2, single buffered']
    #allocation3 [shape = 's32[1]{0}', space=sflag, size = 0x4, scoped, tag = 'scoped memory for tpu_custom_call.1']
    #allocation4 [shape = 's32[1]{0}', space=sflag, size = 0x4, scoped, tag = 'scoped memory for tpu_custom_call.1']
    #allocation5 [shape = 'u8[8192]{0}', space=vmem, size = 0x2000, scoped, tag = 'output window, operand 0, single buffered']
    %9 = vsyncpa [#allocation3], 0
    %10 = vsyncpa [#allocation4], 0
    // Predicated region
    $region2: #{tpu_custom_call.1} parent=1 // pred_check
      _
    $region3: #{tpu_custom_call.1} parent=1 // pred_check_branch
      %12 = sbr.rel (0) target = $region5
    $region4: #{tpu_custom_call.1} parent=1 // pred_region
      _
    $region5: #{tpu_custom_call.1} parent=1 // pred_fallthru
      _
    // Predicated region
    $region6: #{tpu_custom_call.1} parent=1 // pred_check
      _
    $region7: #{tpu_custom_call.1} parent=1 // pred_check_branch
      %14 = sbr.rel (0) target = $region9
    $region8: #{tpu_custom_call.1} parent=1 // pred_region
      _
    $region9: #{tpu_custom_call.1} parent=1 // pred_fallthru
      _
    // Predicated region
    $region10: #{tpu_custom_call.1} parent=1 // pred_check
      _
    $region11: #{tpu_custom_call.1} parent=1 // pred_check_branch
      %16 = sbr.rel (0) target = $region13
    $region12: #{tpu_custom_call.1} parent=1 // pred_region
      %18 = vsyncadd [#allocation3], 0
      %s19 = sshll.u32 %s2, 4
      %s20 = int_to_ptr.hbm [resolvable:$true] %s19
      %s21 = sshll.u32 [#allocation2], 4
      %s22 = int_to_ptr.vmem [resolvable:$true] %s21
      %27 = dma.hbm_to_vmem [thread:$0]  %s20, 2048, %s22, [#allocation3], 64, 64, 4
    $region13: #{tpu_custom_call.1} parent=1 // pred_fallthru
      _
    // Predicated region
    $region14: #{tpu_custom_call.1} parent=1 // pred_check
      _
    $region15: #{tpu_custom_call.1} parent=1 // pred_check_branch
      %29 = sbr.rel (0) target = $region17
    $region16: #{tpu_custom_call.1} parent=1 // pred_region
      _
    $region17: #{tpu_custom_call.1} parent=1 // pred_fallthru
      _
    // Predicated region
    $region18: #{tpu_custom_call.1} parent=1 // pred_check
      _
    $region19: #{tpu_custom_call.1} parent=1 // pred_check_branch
      %31 = sbr.rel (0) target = $region21
    $region20: #{tpu_custom_call.1} parent=1 // pred_region
      %33 = dma.done [#allocation3], 2048
    $region21: #{tpu_custom_call.1} parent=1 // pred_fallthru
      _
    %s35 = smul.u32 0, 16
    %v36 = vld [vmem:[%s0] sm:$0xff]
    %v37 = vld [vmem:[%s0 + $0x8] sm:$0xff]
    %v38 = vld [vmem:[%s1] sm:$0x1]
    %v39 = vld [vmem:[%s1 + $0x1] sm:$0x1]
    %v40 = vld [vmem:[%s1 + $0x2] sm:$0x1]
    %v41 = vsub.f32 %v36, 1.0
    %v42 = vsub.f32 %v37, 1.0
    %v43 = vadd.f32 %v36, 1.0
    %v44 = vadd.f32 %v37, 1.0
    %v45 = vperm.slane %v38, 0
    %47 = vset.pattern.permute.xlu0 0
    %48 = vperm.xlu0 %47, %v41
    %v49 = vpop.permute.xlu0 %48
    %52 = vset.pattern.permute.xlu0 0
    %53 = vperm.xlu0 %52, %v42
    %v54 = vpop.permute.xlu0 %53
    %v56 = vsub.f32 %v45, %v49
    %v57 = vsub.f32 %v45, %v54
    %v58 = vrcp.pop 2.0
    %v59 = vmul.f32 2.0, %v58
    %v60 = vsub.f32 1.0, %v59
    %v61 = vmul.f32 %v58, %v60
    %v62 = vadd.f32 %v58, %v61
    %vm63 = vweird.f32 %v58
    %v64 = vsel %vm63, %v58, %v62
    %v65 = vmul.f32 %v56, %v64
    %v66 = vmul.f32 %v57, %v64
    %v67 = vmul.f32 %v65, 4.0
    %v68 = vmul.f32 %v66, 4.0
    %v69 = vfloor.f32 %v67
    %v70 = vfloor.f32 %v68
    %72 = vset.pattern.permute.xlu0 1
    %73 = vperm.xlu0 %72, %v43
    %v74 = vpop.permute.xlu0 %73
    %77 = vset.pattern.permute.xlu0 1
    %78 = vperm.xlu0 %77, %v44
    %v79 = vpop.permute.xlu0 %78
    %v81 = vperm.slane %v39, 0
    %v82 = vsub.f32 %v74, %v81
    %v83 = vsub.f32 %v79, %v81
    %v84 = vmul.f32 %v82, %v64
    %v85 = vmul.f32 %v83, %v64
    %v86 = vmul.f32 %v84, 4.0
    %v87 = vmul.f32 %v85, 4.0
    %v88 = vfloor.f32 %v86
    %v89 = vfloor.f32 %v87
    %v90 = vmul.f32 %v88, 4.0
    %v91 = vmul.f32 %v89, 4.0
    %v92 = vadd.f32 %v69, %v90
    %v93 = vadd.f32 %v70, %v91
    %v94 = vcvt.f32.s32.to.zero.pseudo %v92
    %v95 = vcvt.f32.s32.to.zero.pseudo %v93
    %96 = vset.pattern.permute.xlu0 0
    %97 = vperm.xlu0 %96, %v43
    %v98 = vpop.permute.xlu0 %97
    %100 = vset.pattern.permute.xlu0 0
    %101 = vperm.xlu0 %100, %v44
    %v102 = vpop.permute.xlu0 %101
    %vm104 = vcmp.ge.f32.partialorder %v45, %v98
    %vm105 = vcmp.ge.f32.partialorder %v45, %v102
    %vm106 = vcmp.le.f32.partialorder %v45, %v49
    %vm107 = vcmp.le.f32.partialorder %v45, %v54
    %vm108 = vmor %vm104, %vm106
    %vm109 = vmor %vm105, %vm107
    %vm110 = vcmp.ge.f32.partialorder %v81, %v74
    %vm111 = vcmp.ge.f32.partialorder %v81, %v79
    %vm112 = vmor %vm108, %vm110
    %vm113 = vmor %vm109, %vm111
    %114 = vset.pattern.permute.xlu0 1
    %115 = vperm.xlu0 %114, %v41
    %v116 = vpop.permute.xlu0 %115
    %118 = vset.pattern.permute.xlu0 1
    %119 = vperm.xlu0 %118, %v42
    %v120 = vpop.permute.xlu0 %119
    %vm122 = vcmp.le.f32.partialorder %v81, %v116
    %vm123 = vcmp.le.f32.partialorder %v81, %v120
    %vm124 = vmor %vm112, %vm122
    %vm125 = vmor %vm113, %vm123
    %v126 = vlaneseq
    %v127 = vshrl.u32 %v126, 7
    %v128 = vadd.s32 %v127, 8
    %v129 = vstv %s35
    %v130 = vadd.s32 %v129, %v127
    %v131 = vadd.s32 %v129, %v128
    %v132 = vlaneseq
    %v133 = vand.u32 %v132, 127
    %135 = vset.pattern.permute.xlu0 2
    %136 = vperm.xlu0 %135, %v36
    %v137 = vpop.permute.xlu0 %136
    %140 = vset.pattern.permute.xlu0 2
    %141 = vperm.xlu0 %140, %v37
    %v142 = vpop.permute.xlu0 %141
    %v144 = vperm.slane %v40, 0
    %vm145 = vcmp.eq.f32.partialorder %v137, %v144
    %vm146 = vcmp.eq.f32.partialorder %v142, %v144
    %vm147 = vmxor %vm124, 1
    %vm148 = vmxor %vm125, 1
    %vm149 = vmand %vm145, %vm147
    %vm150 = vmand %vm146, %vm148
    %vm151 = vcmp.ne.s32.totalorder %v130, %v133
    %vm152 = vcmp.ne.s32.totalorder %v131, %v133
    %vm153 = vmand %vm149, %vm151
    %vm154 = vmand %vm150, %vm152
    %vm155 = vcmp.ge.s32.totalorder %v94, 0
    %vm156 = vcmp.ge.s32.totalorder %v95, 0
    %vm157 = vmand %vm153, %vm155
    %vm158 = vmand %vm154, %vm156
    %vm159 = vcmp.lt.s32.totalorder %v94, 16
    %vm160 = vcmp.lt.s32.totalorder %v95, 16
    %vm161 = vmand %vm157, %vm159
    %vm162 = vmand %vm158, %vm160
    %v163 = vsel %vm161, %v94, 4294967295
    %v164 = vsel %vm162, %v95, 4294967295
    %vm165 = vcmp.eq.s32.totalorder %v163, 0
    %vm166 = vcmp.eq.s32.totalorder %v164, 0
    %v167 = vsel %vm165, 1, 0
    %v168 = vsel %vm166, 1, 0
    %v169 = vcvt.s32.f32 %v167
    %v170 = vcvt.s32.f32 %v168
    %v171 = vpack.c.bf16 %v170, %v169
    %v172 = vld [vmem:[#allocation2] sm:$0xf]
    %v173 = vld [vmem:[#allocation2 + $0x4] sm:$0xf]
    %vm174 = vcmp.eq.s32.totalorder %v163, 1
    %vm175 = vcmp.eq.s32.totalorder %v164, 1
    %v176 = vsel %vm174, 1, 0
    %v177 = vsel %vm175, 1, 0
    %v178 = vcvt.s32.f32 %v176
    %v179 = vcvt.s32.f32 %v177
    %v180 = vpack.c.bf16 %v179, %v178
    %s181 = scalar_lea.vmem [#allocation2], 8
    %v182 = vld [vmem:[%s181] sm:$0xf]
    %v183 = vld [vmem:[%s181 + $0x4] sm:$0xf]
    %v186 = vunpack.c.l.b16 %v182
    %v187 = vunpack.c.l.b16 %v183
    %v188 = vpack.c.b16 %v187, %v186
    %vm190 = vcmask 130048
    %v192 = vsel %vm190, %v180, 0
    %194 = vmatpush.bf16.msra.mxu0 0
    %195 = vmatpush.bf16.msra.mxu0 0
    %196 = vmatpush.bf16.msra.mxu0 0
    %197 = vmatpush.bf16.msra.mxu0 0
    %198 = vmatpush.bf16.msra.mxu0 0
    %199 = vmatpush.bf16.msra.mxu0 0
    %200 = vmatpush.bf16.msra.mxu0 0
    %201 = vmatpush.bf16.msra.mxu0 %v188
    %202 = vmatmul.bf16.gmra.mxu0 %v192
    %v203 = vpop.f32.mrf.mxu0
    %v204 = vadd.f32 0.0, %v203
    %v205 = vpop.f32.mrf.mxu0
    %v206 = vadd.f32 0.0, %v205
    %207 = vdwg.mxu0
    %v210 = vunpack.c.l.b16 %v172
    %v211 = vunpack.c.l.b16 %v173
    %v212 = vpack.c.b16 %v211, %v210
    %v215 = vsel %vm190, %v171, 0
    %217 = vmatpush.bf16.msra.mxu0 0
    %218 = vmatpush.bf16.msra.mxu0 0
    %219 = vmatpush.bf16.msra.mxu0 0
    %220 = vmatpush.bf16.msra.mxu0 0
    %221 = vmatpush.bf16.msra.mxu0 0
    %222 = vmatpush.bf16.msra.mxu0 0
    %223 = vmatpush.bf16.msra.mxu0 0
    %224 = vmatpush.bf16.msra.mxu0 %v212
    %225 = vmatmul.bf16.gmra.mxu0 %v215
    %v226 = vpop.f32.mrf.mxu0
    %v227 = vadd.f32 %v204, %v226
    %v228 = vpop.f32.mrf.mxu0
    %v229 = vadd.f32 %v206, %v228
    %230 = vdwg.mxu0
    %vm231 = vcmp.eq.s32.totalorder %v163, 2
    %vm232 = vcmp.eq.s32.totalorder %v164, 2
    %v233 = vsel %vm231, 1, 0
    %v234 = vsel %vm232, 1, 0
    %v235 = vcvt.s32.f32 %v233
    %v236 = vcvt.s32.f32 %v234
    %v237 = vpack.c.bf16 %v236, %v235
    %s238 = scalar_lea.vmem [#allocation2], 16
    %v239 = vld [vmem:[%s238] sm:$0xf]
    %v240 = vld [vmem:[%s238 + $0x4] sm:$0xf]
    %v243 = vunpack.c.l.b16 %v239
    %v244 = vunpack.c.l.b16 %v240
    %v245 = vpack.c.b16 %v244, %v243
    %v248 = vsel %vm190, %v237, 0
    %250 = vmatpush.bf16.msra.mxu0 0
    %251 = vmatpush.bf16.msra.mxu0 0
    %252 = vmatpush.bf16.msra.mxu0 0
    %253 = vmatpush.bf16.msra.mxu0 0
    %254 = vmatpush.bf16.msra.mxu0 0
    %255 = vmatpush.bf16.msra.mxu0 0
    %256 = vmatpush.bf16.msra.mxu0 0
    %257 = vmatpush.bf16.msra.mxu0 %v245
    %258 = vmatmul.bf16.gmra.mxu0 %v248
    %v259 = vpop.f32.mrf.mxu0
    %v260 = vadd.f32 0.0, %v259
    %v261 = vpop.f32.mrf.mxu0
    %v262 = vadd.f32 0.0, %v261
    %263 = vdwg.mxu0
    %v264 = vadd.f32 %v227, %v260
    %v265 = vadd.f32 %v229, %v262
    %vm266 = vcmp.eq.s32.totalorder %v163, 3
    %vm267 = vcmp.eq.s32.totalorder %v164, 3
    %v268 = vsel %vm266, 1, 0
    %v269 = vsel %vm267, 1, 0
    %v270 = vcvt.s32.f32 %v268
    %v271 = vcvt.s32.f32 %v269
    %v272 = vpack.c.bf16 %v271, %v270
    %s273 = scalar_lea.vmem [#allocation2], 24
    %v274 = vld [vmem:[%s273] sm:$0xf]
    %v275 = vld [vmem:[%s273 + $0x4] sm:$0xf]
    %v278 = vunpack.c.l.b16 %v274
    %v279 = vunpack.c.l.b16 %v275
    %v280 = vpack.c.b16 %v279, %v278
    %v283 = vsel %vm190, %v272, 0
    %285 = vmatpush.bf16.msra.mxu0 0
    %286 = vmatpush.bf16.msra.mxu0 0
    %287 = vmatpush.bf16.msra.mxu0 0
    %288 = vmatpush.bf16.msra.mxu0 0
    %289 = vmatpush.bf16.msra.mxu0 0
    %290 = vmatpush.bf16.msra.mxu0 0
    %291 = vmatpush.bf16.msra.mxu0 0
    %292 = vmatpush.bf16.msra.mxu0 %v280
    %293 = vmatmul.bf16.gmra.mxu0 %v283
    %v294 = vpop.f32.mrf.mxu0
    %v295 = vadd.f32 0.0, %v294
    %v296 = vpop.f32.mrf.mxu0
    %v297 = vadd.f32 0.0, %v296
    %298 = vdwg.mxu0
    %v299 = vadd.f32 %v264, %v295
    %v300 = vadd.f32 %v265, %v297
    %vm301 = vcmp.eq.s32.totalorder %v163, 4
    %vm302 = vcmp.eq.s32.totalorder %v164, 4
    %v303 = vsel %vm301, 1, 0
    %v304 = vsel %vm302, 1, 0
    %v305 = vcvt.s32.f32 %v303
    %v306 = vcvt.s32.f32 %v304
    %v307 = vpack.c.bf16 %v306, %v305
    %s308 = scalar_lea.vmem [#allocation2], 32
    %v309 = vld [vmem:[%s308] sm:$0xf]
    %v310 = vld [vmem:[%s308 + $0x4] sm:$0xf]
    %v313 = vunpack.c.l.b16 %v309
    %v314 = vunpack.c.l.b16 %v310
    %v315 = vpack.c.b16 %v314, %v313
    %v318 = vsel %vm190, %v307, 0
    %320 = vmatpush.bf16.msra.mxu0 0
    %321 = vmatpush.bf16.msra.mxu0 0
    %322 = vmatpush.bf16.msra.mxu0 0
    %323 = vmatpush.bf16.msra.mxu0 0
    %324 = vmatpush.bf16.msra.mxu0 0
    %325 = vmatpush.bf16.msra.mxu0 0
    %326 = vmatpush.bf16.msra.mxu0 0
    %327 = vmatpush.bf16.msra.mxu0 %v315
    %328 = vmatmul.bf16.gmra.mxu0 %v318
    %v329 = vpop.f32.mrf.mxu0
    %v330 = vadd.f32 0.0, %v329
    %v331 = vpop.f32.mrf.mxu0
    %v332 = vadd.f32 0.0, %v331
    %333 = vdwg.mxu0
    %v334 = vadd.f32 %v299, %v330
    %v335 = vadd.f32 %v300, %v332
    %vm336 = vcmp.eq.s32.totalorder %v163, 5
    %vm337 = vcmp.eq.s32.totalorder %v164, 5
    %v338 = vsel %vm336, 1, 0
    %v339 = vsel %vm337, 1, 0
    %v340 = vcvt.s32.f32 %v338
    %v341 = vcvt.s32.f32 %v339
    %v342 = vpack.c.bf16 %v341, %v340
    %s343 = scalar_lea.vmem [#allocation2], 40
    %v344 = vld [vmem:[%s343] sm:$0xf]
    %v345 = vld [vmem:[%s343 + $0x4] sm:$0xf]
    %v348 = vunpack.c.l.b16 %v344
    %v349 = vunpack.c.l.b16 %v345
    %v350 = vpack.c.b16 %v349, %v348
    %v353 = vsel %vm190, %v342, 0
    %355 = vmatpush.bf16.msra.mxu0 0
    %356 = vmatpush.bf16.msra.mxu0 0
    %357 = vmatpush.bf16.msra.mxu0 0
    %358 = vmatpush.bf16.msra.mxu0 0
    %359 = vmatpush.bf16.msra.mxu0 0
    %360 = vmatpush.bf16.msra.mxu0 0
    %361 = vmatpush.bf16.msra.mxu0 0
    %362 = vmatpush.bf16.msra.mxu0 %v350
    %363 = vmatmul.bf16.gmra.mxu0 %v353
    %v364 = vpop.f32.mrf.mxu0
    %v365 = vadd.f32 0.0, %v364
    %v366 = vpop.f32.mrf.mxu0
    %v367 = vadd.f32 0.0, %v366
    %368 = vdwg.mxu0
    %v369 = vadd.f32 %v334, %v365
    %v370 = vadd.f32 %v335, %v367
    %vm371 = vcmp.eq.s32.totalorder %v163, 6
    %vm372 = vcmp.eq.s32.totalorder %v164, 6
    %v373 = vsel %vm371, 1, 0
    %v374 = vsel %vm372, 1, 0
    %v375 = vcvt.s32.f32 %v373
    %v376 = vcvt.s32.f32 %v374
    %v377 = vpack.c.bf16 %v376, %v375
    %s378 = scalar_lea.vmem [#allocation2], 48
    %v379 = vld [vmem:[%s378] sm:$0xf]
    %v380 = vld [vmem:[%s378 + $0x4] sm:$0xf]
    %v383 = vunpack.c.l.b16 %v379
    %v384 = vunpack.c.l.b16 %v380
    %v385 = vpack.c.b16 %v384, %v383
    %v388 = vsel %vm190, %v377, 0
    %390 = vmatpush.bf16.msra.mxu0 0
    %391 = vmatpush.bf16.msra.mxu0 0
    %392 = vmatpush.bf16.msra.mxu0 0
    %393 = vmatpush.bf16.msra.mxu0 0
    %394 = vmatpush.bf16.msra.mxu0 0
    %395 = vmatpush.bf16.msra.mxu0 0
    %396 = vmatpush.bf16.msra.mxu0 0
    %397 = vmatpush.bf16.msra.mxu0 %v385
    %398 = vmatmul.bf16.gmra.mxu0 %v388
    %v399 = vpop.f32.mrf.mxu0
    %v400 = vadd.f32 0.0, %v399
    %v401 = vpop.f32.mrf.mxu0
    %v402 = vadd.f32 0.0, %v401
    %403 = vdwg.mxu0
    %v404 = vadd.f32 %v369, %v400
    %v405 = vadd.f32 %v370, %v402
    %vm406 = vcmp.eq.s32.totalorder %v163, 7
    %vm407 = vcmp.eq.s32.totalorder %v164, 7
    %v408 = vsel %vm406, 1, 0
    %v409 = vsel %vm407, 1, 0
    %v410 = vcvt.s32.f32 %v408
    %v411 = vcvt.s32.f32 %v409
    %v412 = vpack.c.bf16 %v411, %v410
    %s413 = scalar_lea.vmem [#allocation2], 56
    %v414 = vld [vmem:[%s413] sm:$0xf]
    %v415 = vld [vmem:[%s413 + $0x4] sm:$0xf]
    %v418 = vunpack.c.l.b16 %v414
    %v419 = vunpack.c.l.b16 %v415
    %v420 = vpack.c.b16 %v419, %v418
    %v423 = vsel %vm190, %v412, 0
    %425 = vmatpush.bf16.msra.mxu0 0
    %426 = vmatpush.bf16.msra.mxu0 0
    %427 = vmatpush.bf16.msra.mxu0 0
    %428 = vmatpush.bf16.msra.mxu0 0
    %429 = vmatpush.bf16.msra.mxu0 0
    %430 = vmatpush.bf16.msra.mxu0 0
    %431 = vmatpush.bf16.msra.mxu0 0
    %432 = vmatpush.bf16.msra.mxu0 %v420
    %433 = vmatmul.bf16.gmra.mxu0 %v423
    %v434 = vpop.f32.mrf.mxu0
    %v435 = vadd.f32 0.0, %v434
    %v436 = vpop.f32.mrf.mxu0
    %v437 = vadd.f32 0.0, %v436
    %438 = vdwg.mxu0
    %v439 = vadd.f32 %v404, %v435
    %v440 = vadd.f32 %v405, %v437
    %vm441 = vcmp.eq.s32.totalorder %v163, 8
    %vm442 = vcmp.eq.s32.totalorder %v164, 8
    %v443 = vsel %vm441, 1, 0
    %v444 = vsel %vm442, 1, 0
    %v445 = vcvt.s32.f32 %v443
    %v446 = vcvt.s32.f32 %v444
    %v447 = vpack.c.bf16 %v446, %v445
    %s448 = scalar_lea.vmem [#allocation2], 64
    %v449 = vld [vmem:[%s448] sm:$0xf]
    %v450 = vld [vmem:[%s448 + $0x4] sm:$0xf]
    %v453 = vunpack.c.l.b16 %v449
    %v454 = vunpack.c.l.b16 %v450
    %v455 = vpack.c.b16 %v454, %v453
    %v458 = vsel %vm190, %v447, 0
    %460 = vmatpush.bf16.msra.mxu0 0
    %461 = vmatpush.bf16.msra.mxu0 0
    %462 = vmatpush.bf16.msra.mxu0 0
    %463 = vmatpush.bf16.msra.mxu0 0
    %464 = vmatpush.bf16.msra.mxu0 0
    %465 = vmatpush.bf16.msra.mxu0 0
    %466 = vmatpush.bf16.msra.mxu0 0
    %467 = vmatpush.bf16.msra.mxu0 %v455
    %468 = vmatmul.bf16.gmra.mxu0 %v458
    %v469 = vpop.f32.mrf.mxu0
    %v470 = vadd.f32 0.0, %v469
    %v471 = vpop.f32.mrf.mxu0
    %v472 = vadd.f32 0.0, %v471
    %473 = vdwg.mxu0
    %v474 = vadd.f32 %v439, %v470
    %v475 = vadd.f32 %v440, %v472
    %vm476 = vcmp.eq.s32.totalorder %v163, 9
    %vm477 = vcmp.eq.s32.totalorder %v164, 9
    %v478 = vsel %vm476, 1, 0
    %v479 = vsel %vm477, 1, 0
    %v480 = vcvt.s32.f32 %v478
    %v481 = vcvt.s32.f32 %v479
    %v482 = vpack.c.bf16 %v481, %v480
    %s483 = scalar_lea.vmem [#allocation2], 72
    %v484 = vld [vmem:[%s483] sm:$0xf]
    %v485 = vld [vmem:[%s483 + $0x4] sm:$0xf]
    %v488 = vunpack.c.l.b16 %v484
    %v489 = vunpack.c.l.b16 %v485
    %v490 = vpack.c.b16 %v489, %v488
    %v493 = vsel %vm190, %v482, 0
    %495 = vmatpush.bf16.msra.mxu0 0
    %496 = vmatpush.bf16.msra.mxu0 0
    %497 = vmatpush.bf16.msra.mxu0 0
    %498 = vmatpush.bf16.msra.mxu0 0
    %499 = vmatpush.bf16.msra.mxu0 0
    %500 = vmatpush.bf16.msra.mxu0 0
    %501 = vmatpush.bf16.msra.mxu0 0
    %502 = vmatpush.bf16.msra.mxu0 %v490
    %503 = vmatmul.bf16.gmra.mxu0 %v493
    %v504 = vpop.f32.mrf.mxu0
    %v505 = vadd.f32 0.0, %v504
    %v506 = vpop.f32.mrf.mxu0
    %v507 = vadd.f32 0.0, %v506
    %508 = vdwg.mxu0
    %v509 = vadd.f32 %v474, %v505
    %v510 = vadd.f32 %v475, %v507
    %vm511 = vcmp.eq.s32.totalorder %v163, 10
    %vm512 = vcmp.eq.s32.totalorder %v164, 10
    %v513 = vsel %vm511, 1, 0
    %v514 = vsel %vm512, 1, 0
    %v515 = vcvt.s32.f32 %v513
    %v516 = vcvt.s32.f32 %v514
    %v517 = vpack.c.bf16 %v516, %v515
    %s518 = scalar_lea.vmem [#allocation2], 80
    %v519 = vld [vmem:[%s518] sm:$0xf]
    %v520 = vld [vmem:[%s518 + $0x4] sm:$0xf]
    %v523 = vunpack.c.l.b16 %v519
    %v524 = vunpack.c.l.b16 %v520
    %v525 = vpack.c.b16 %v524, %v523
    %v528 = vsel %vm190, %v517, 0
    %530 = vmatpush.bf16.msra.mxu0 0
    %531 = vmatpush.bf16.msra.mxu0 0
    %532 = vmatpush.bf16.msra.mxu0 0
    %533 = vmatpush.bf16.msra.mxu0 0
    %534 = vmatpush.bf16.msra.mxu0 0
    %535 = vmatpush.bf16.msra.mxu0 0
    %536 = vmatpush.bf16.msra.mxu0 0
    %537 = vmatpush.bf16.msra.mxu0 %v525
    %538 = vmatmul.bf16.gmra.mxu0 %v528
    %v539 = vpop.f32.mrf.mxu0
    %v540 = vadd.f32 0.0, %v539
    %v541 = vpop.f32.mrf.mxu0
    %v542 = vadd.f32 0.0, %v541
    %543 = vdwg.mxu0
    %v544 = vadd.f32 %v509, %v540
    %v545 = vadd.f32 %v510, %v542
    %vm546 = vcmp.eq.s32.totalorder %v163, 11
    %vm547 = vcmp.eq.s32.totalorder %v164, 11
    %v548 = vsel %vm546, 1, 0
    %v549 = vsel %vm547, 1, 0
    %v550 = vcvt.s32.f32 %v548
    %v551 = vcvt.s32.f32 %v549
    %v552 = vpack.c.bf16 %v551, %v550
    %s553 = scalar_lea.vmem [#allocation2], 88
    %v554 = vld [vmem:[%s553] sm:$0xf]
    %v555 = vld [vmem:[%s553 + $0x4] sm:$0xf]
    %v558 = vunpack.c.l.b16 %v554
    %v559 = vunpack.c.l.b16 %v555
    %v560 = vpack.c.b16 %v559, %v558
    %v563 = vsel %vm190, %v552, 0
    %565 = vmatpush.bf16.msra.mxu0 0
    %566 = vmatpush.bf16.msra.mxu0 0
    %567 = vmatpush.bf16.msra.mxu0 0
    %568 = vmatpush.bf16.msra.mxu0 0
    %569 = vmatpush.bf16.msra.mxu0 0
    %570 = vmatpush.bf16.msra.mxu0 0
    %571 = vmatpush.bf16.msra.mxu0 0
    %572 = vmatpush.bf16.msra.mxu0 %v560
    %573 = vmatmul.bf16.gmra.mxu0 %v563
    %v574 = vpop.f32.mrf.mxu0
    %v575 = vadd.f32 0.0, %v574
    %v576 = vpop.f32.mrf.mxu0
    %v577 = vadd.f32 0.0, %v576
    %578 = vdwg.mxu0
    %v579 = vadd.f32 %v544, %v575
    %v580 = vadd.f32 %v545, %v577
    %vm581 = vcmp.eq.s32.totalorder %v163, 12
    %vm582 = vcmp.eq.s32.totalorder %v164, 12
    %v583 = vsel %vm581, 1, 0
    %v584 = vsel %vm582, 1, 0
    %v585 = vcvt.s32.f32 %v583
    %v586 = vcvt.s32.f32 %v584
    %v587 = vpack.c.bf16 %v586, %v585
    %s588 = scalar_lea.vmem [#allocation2], 96
    %v589 = vld [vmem:[%s588] sm:$0xf]
    %v590 = vld [vmem:[%s588 + $0x4] sm:$0xf]
    %v593 = vunpack.c.l.b16 %v589
    %v594 = vunpack.c.l.b16 %v590
    %v595 = vpack.c.b16 %v594, %v593
    %v598 = vsel %vm190, %v587, 0
    %600 = vmatpush.bf16.msra.mxu0 0
    %601 = vmatpush.bf16.msra.mxu0 0
    %602 = vmatpush.bf16.msra.mxu0 0
    %603 = vmatpush.bf16.msra.mxu0 0
    %604 = vmatpush.bf16.msra.mxu0 0
    %605 = vmatpush.bf16.msra.mxu0 0
    %606 = vmatpush.bf16.msra.mxu0 0
    %607 = vmatpush.bf16.msra.mxu0 %v595
    %608 = vmatmul.bf16.gmra.mxu0 %v598
    %v609 = vpop.f32.mrf.mxu0
    %v610 = vadd.f32 0.0, %v609
    %v611 = vpop.f32.mrf.mxu0
    %v612 = vadd.f32 0.0, %v611
    %613 = vdwg.mxu0
    %v614 = vadd.f32 %v579, %v610
    %v615 = vadd.f32 %v580, %v612
    %vm616 = vcmp.eq.s32.totalorder %v163, 13
    %vm617 = vcmp.eq.s32.totalorder %v164, 13
    %v618 = vsel %vm616, 1, 0
    %v619 = vsel %vm617, 1, 0
    %v620 = vcvt.s32.f32 %v618
    %v621 = vcvt.s32.f32 %v619
    %v622 = vpack.c.bf16 %v621, %v620
    %s623 = scalar_lea.vmem [#allocation2], 104
    %v624 = vld [vmem:[%s623] sm:$0xf]
    %v625 = vld [vmem:[%s623 + $0x4] sm:$0xf]
    %v628 = vunpack.c.l.b16 %v624
    %v629 = vunpack.c.l.b16 %v625
    %v630 = vpack.c.b16 %v629, %v628
    %v633 = vsel %vm190, %v622, 0
    %635 = vmatpush.bf16.msra.mxu0 0
    %636 = vmatpush.bf16.msra.mxu0 0
    %637 = vmatpush.bf16.msra.mxu0 0
    %638 = vmatpush.bf16.msra.mxu0 0
    %639 = vmatpush.bf16.msra.mxu0 0
    %640 = vmatpush.bf16.msra.mxu0 0
    %641 = vmatpush.bf16.msra.mxu0 0
    %642 = vmatpush.bf16.msra.mxu0 %v630
    %643 = vmatmul.bf16.gmra.mxu0 %v633
    %v644 = vpop.f32.mrf.mxu0
    %v645 = vadd.f32 0.0, %v644
    %v646 = vpop.f32.mrf.mxu0
    %v647 = vadd.f32 0.0, %v646
    %648 = vdwg.mxu0
    %v649 = vadd.f32 %v614, %v645
    %v650 = vadd.f32 %v615, %v647
    %vm651 = vcmp.eq.s32.totalorder %v163, 14
    %vm652 = vcmp.eq.s32.totalorder %v164, 14
    %v653 = vsel %vm651, 1, 0
    %v654 = vsel %vm652, 1, 0
    %v655 = vcvt.s32.f32 %v653
    %v656 = vcvt.s32.f32 %v654
    %v657 = vpack.c.bf16 %v656, %v655
    %s658 = scalar_lea.vmem [#allocation2], 112
    %v659 = vld [vmem:[%s658] sm:$0xf]
    %v660 = vld [vmem:[%s658 + $0x4] sm:$0xf]
    %v663 = vunpack.c.l.b16 %v659
    %v664 = vunpack.c.l.b16 %v660
    %v665 = vpack.c.b16 %v664, %v663
    %v668 = vsel %vm190, %v657, 0
    %670 = vmatpush.bf16.msra.mxu0 0
    %671 = vmatpush.bf16.msra.mxu0 0
    %672 = vmatpush.bf16.msra.mxu0 0
    %673 = vmatpush.bf16.msra.mxu0 0
    %674 = vmatpush.bf16.msra.mxu0 0
    %675 = vmatpush.bf16.msra.mxu0 0
    %676 = vmatpush.bf16.msra.mxu0 0
    %677 = vmatpush.bf16.msra.mxu0 %v665
    %678 = vmatmul.bf16.gmra.mxu0 %v668
    %v679 = vpop.f32.mrf.mxu0
    %v680 = vadd.f32 0.0, %v679
    %v681 = vpop.f32.mrf.mxu0
    %v682 = vadd.f32 0.0, %v681
    %683 = vdwg.mxu0
    %v684 = vadd.f32 %v649, %v680
    %v685 = vadd.f32 %v650, %v682
    %vm686 = vcmp.eq.s32.totalorder %v163, 15
    %vm687 = vcmp.eq.s32.totalorder %v164, 15
    %v688 = vsel %vm686, 1, 0
    %v689 = vsel %vm687, 1, 0
    %v690 = vcvt.s32.f32 %v688
    %v691 = vcvt.s32.f32 %v689
    %v692 = vpack.c.bf16 %v691, %v690
    %s693 = scalar_lea.vmem [#allocation2], 120
    %v694 = vld [vmem:[%s693] sm:$0xf]
    %v695 = vld [vmem:[%s693 + $0x4] sm:$0xf]
    %v698 = vunpack.c.l.b16 %v694
    %v699 = vunpack.c.l.b16 %v695
    %v700 = vpack.c.b16 %v699, %v698
    %v703 = vsel %vm190, %v692, 0
    %705 = vmatpush.bf16.msra.mxu0 0
    %706 = vmatpush.bf16.msra.mxu0 0
    %707 = vmatpush.bf16.msra.mxu0 0
    %708 = vmatpush.bf16.msra.mxu0 0
    %709 = vmatpush.bf16.msra.mxu0 0
    %710 = vmatpush.bf16.msra.mxu0 0
    %711 = vmatpush.bf16.msra.mxu0 0
    %712 = vmatpush.bf16.msra.mxu0 %v700
    %713 = vmatmul.bf16.gmra.mxu0 %v703
    %v714 = vpop.f32.mrf.mxu0
    %v715 = vadd.f32 0.0, %v714
    %v716 = vpop.f32.mrf.mxu0
    %v717 = vadd.f32 0.0, %v716
    %718 = vdwg.mxu0
    %v719 = vadd.f32 %v684, %v715
    %v720 = vadd.f32 %v685, %v717
    %v721 = vld [vmem:[%s3] sm:$0x1]
    %v723 = vperm.slane %v721, 0
    %v725 = vadd.f32 %v719, %v723
    %v726 = vadd.f32 %v720, %v723
    %727 = vst.msk [vmem:[#allocation5] sm:$0xff] %vm190, %v725
    %728 = vst.msk [vmem:[#allocation5 + $0x8] sm:$0xff] %vm190, %v726
    // Predicated region
    $region22: #{tpu_custom_call.1} parent=1 // pred_check
      _
    $region23: #{tpu_custom_call.1} parent=1 // pred_check_branch
      %730 = sbr.rel (0) target = $region25
    $region24: #{tpu_custom_call.1} parent=1 // pred_region
      %732 = vsyncadd [#allocation4], 0
      %s733 = sshll.u32 [#allocation5], 4
      %s734 = int_to_ptr.vmem [resolvable:$true] %s733
      %s735 = sshll.u32 %s4, 4
      %s736 = int_to_ptr.hbm [resolvable:$true] %s735
      %741 = dma.vmem_to_hbm [thread:$0]  %s734, 256, %s736, [#allocation4], 128, 128, 8
    $region25: #{tpu_custom_call.1} parent=1 // pred_fallthru
      _
    // Predicated region
    $region26: #{tpu_custom_call.1} parent=1 // pred_check
      _
    $region27: #{tpu_custom_call.1} parent=1 // pred_check_branch
      %743 = sbr.rel (0) target = $region29
    $region28: #{tpu_custom_call.1} parent=1 // pred_region
      %745 = dma.done [#allocation4], 256
    $region29: #{tpu_custom_call.1} parent=1 // pred_fallthru
      _
    %746 = vsyncpa [#allocation3], 1
    %747 = vsyncpa [#allocation4], 1

</llo_original>
